<compile_context>
chip_gen: v7x
topology: tpu7x:2x2x1
jax: 0.10.0
libtpu: 0.0.40
codegen_flags: <defaults>
</compile_context>

<pallas_src>
import functools

import jax
import jax.numpy as jnp
from jax.experimental import pallas as pl
from jax.experimental.pallas import tpu as pltpu


# ----------------------------------------------------------------------------
# Kernel
# ----------------------------------------------------------------------------
def _mts_kernel(x_ref, w1_ref, b1_ref, a_ref, s_ref, bb_ref, x1_ref, br_ref):
    # x_ref : (N*Cin, L)        input, batches stacked on sublanes, time on lanes
    # w1_ref: (N*C1, N*Cin)     block-diag folded (conv1x1 * BN-scale) weights
    # b1_ref: (N*C1, 1)         folded BN bias for l1
    # a_ref : (n_sh, N*Cb, N*C1)  per-shift channel-mixing matrices (all branches)
    # s_ref : (n_sh, L, L)      0/1 time-shift matrices (zero-fill built in)
    # bb_ref: (N*Cb, 1)         folded BN bias for all branches
    # x1_ref: (N*C1, L)         output: l1 result (ReLU'd)
    # br_ref: (N*Cb, L)         output: concatenated S2Conv branch results

    # Phase 1: BasicConv1d l1 = Conv1d(k=1) + folded BN + ReLU, all batches in
    # one lane-dense matmul.
    x1 = jnp.maximum(
        jnp.dot(w1_ref[...], x_ref[...], preferred_element_type=jnp.float32)
        + b1_ref[...],
        0.0,
    )
    x1_ref[...] = x1.astype(x1_ref.dtype)

    # Phase 2: every S2Conv branch, for every batch element, expressed as
    #   sum over distinct shift values sigma of  (A_sigma @ x1) @ S_sigma
    # A_sigma selects/mixes the tx channels with the grouped-conv (BN-folded)
    # weights; S_sigma applies the per-channel time shift with exact zero fill.
    # No strided weight slices, no unaligned lane slices — only MXU matmuls.
    n_shifts = a_ref.shape[0]
    acc = jnp.zeros(br_ref.shape, dtype=jnp.float32)
    for i in range(n_shifts):  # tiny static unrolled loop (<= 2*n_b+1 terms)
        mixed = jnp.dot(a_ref[i], x1, preferred_element_type=jnp.float32)
        acc = acc + jnp.dot(mixed, s_ref[i], preferred_element_type=jnp.float32)

    br_ref[...] = jnp.maximum(acc + bb_ref[...], 0.0).astype(br_ref.dtype)


# ----------------------------------------------------------------------------
# Wrapper (all folding / layout plumbing happens here, one time, outside the
# kernel's hot path)
# ----------------------------------------------------------------------------
def _split_branch(total_channels, num_groups):
    split = [total_channels // num_groups for _ in range(num_groups)]
    split[0] += total_channels - sum(split)
    return split


def _fold_bn(gamma, beta, mean, var, eps):
    # TODO(synk): PyTorch's default .train() BatchNorm would use batch
    # statistics; this kernel implements the eval/inference semantics
    # (running stats), which is what allows folding BN into the conv weights.
    scale = gamma / jnp.sqrt(var + eps)
    bias = beta - mean * scale
    return scale, bias


def mts_module_pallas(x, params, *, n_b, eps=1e-5):
    """Forward pass of MTS_module (eval-mode BN) as one Pallas TPU kernel."""
    N, C_in, L = x.shape
    dtype = x.dtype

    w1 = params["w1"]                      # (C1, C_in, 1), Conv1d k=1, bias=False
    C1 = w1.shape[0]
    c2 = params["branches"][0]["w"].shape[0]   # channels per S2Conv branch
    C_bt = n_b * c2                            # total branch output channels
    R = N * C_bt

    # ---- fold l1: Conv1d(k=1) + BN -> block-diagonal weight over the batch --
    scale1, bias1 = _fold_bn(params["bn1_gamma"], params["bn1_beta"],
                             params["bn1_mean"], params["bn1_var"], eps)
    w1_eff = scale1[:, None] * w1[:, :, 0]                    # (C1, C_in)
    w1_blk = jnp.kron(jnp.eye(N, dtype=dtype), w1_eff)        # (N*C1, N*C_in)
    b1_stack = jnp.tile(bias1, N).reshape(N * C1, 1)

    # ---- static shift geometry of every branch (all Python ints) ------------
    branch_static = []
    shift_set = set()
    for b in range(n_b):
        S = 2 * b + 3                      # MTS_module: shift_size = 2*i + 3 (odd)
        assert S % 2 == 1
        pad = S // 2
        shifts_k = [k % S - pad for k in range(c2)]   # dilation = 1
        branch_static.append((S, pad, shifts_k))
        shift_set.update(shifts_k)
    shift_vals = sorted(shift_set)
    sh_index = {s: i for i, s in enumerate(shift_vals)}
    n_sh = len(shift_vals)

    # ---- fold every S2Conv (shift + channel-pad + window-cat + grouped 1x1
    #      conv + BN) into per-shift channel-mixing matrices -------------------
    a_all = jnp.zeros((n_sh, R, N * C1), dtype=dtype)
    bias_rows = []
    for b in range(n_b):
        S, pad, shifts_k = branch_static[b]
        br = params["branches"][b]
        scale_b, bias_b = _fold_bn(br["gamma"], br["beta"], br["mean"],
                                   br["var"], eps)
        w_eff = scale_b[:, None] * br["w"][:, :, 0]           # (c2, S), BN folded
        for j in range(c2):                 # branch output channel
            for k in range(c2):             # x1 channel feeding it
                s = k - j + pad             # grouped-conv tap hitting channel k
                if 0 <= s < S:
                    si = sh_index[shifts_k[k]]
                    for n in range(N):
                        a_all = a_all.at[si,
                                         n * C_bt + b * c2 + j,
                                         n * C1 + k].set(w_eff[j, s])
        bias_rows.append(bias_b)
    bb_stack = jnp.tile(jnp.concatenate(bias_rows), N).reshape(R, 1)

    # (L, L) time-shift matrices, one per distinct shift value (exact zero fill).
    s_all = jnp.stack([jnp.eye(L, k=int(sv), dtype=dtype) for sv in shift_vals])

    # Batch x channel stacked on sublanes, time on lanes (lane-dense).
    x_stack = x.reshape(N * C_in, L)

    x1_flat, br_flat = pl.pallas_call(
        _mts_kernel,
        out_shape=(jax.ShapeDtypeStruct((N * C1, L), dtype),
                   jax.ShapeDtypeStruct((R, L), dtype)),
        # Whole-array blocks, no grid: everything lives in VMEM for the single
        # invocation; constants are DMA'd exactly once.
        in_specs=[pl.BlockSpec(memory_space=pltpu.MemorySpace.VMEM)] * 6,
        out_specs=(pl.BlockSpec(memory_space=pltpu.MemorySpace.VMEM),
                   pl.BlockSpec(memory_space=pltpu.MemorySpace.VMEM)),
    )(x_stack, w1_blk, b1_stack, a_all, s_all, bb_stack)

    # Free layout plumbing back to the PyTorch (N, C, L) channel order.
    x1 = x1_flat.reshape(N, C1, L)
    br = br_flat.reshape(N, C_bt, L)
    return jnp.concatenate([x1, br], axis=1)


# ----------------------------------------------------------------------------
# Pure-JAX reference mirroring the PyTorch module (eval-mode BN)
# ----------------------------------------------------------------------------
def _mts_reference(x, params, *, n_b, eps=1e-5):
    N, C_in, L = x.shape
    hi = jax.lax.Precision.HIGHEST

    w1 = params["w1"][:, :, 0]
    conv1 = jnp.einsum("oc,ncl->nol", w1, x, precision=hi)
    g, be, m, v = (params["bn1_gamma"], params["bn1_beta"],
                   params["bn1_mean"], params["bn1_var"])
    x1 = jax.nn.relu((conv1 - m[None, :, None]) / jnp.sqrt(v[None, :, None] + eps)
                     * g[None, :, None] + be[None, :, None])

    c2 = params["branches"][0]["w"].shape[0]
    tx = x1[:, :c2, :]
    outs = [x1]
    for b in range(n_b):
        br = params["branches"][b]
        S = 2 * b + 3
        pad = S // 2
        w = br["w"][:, :, 0]                     # (c2, S)
        rows = []
        for k in range(c2):                      # per-channel time shift
            sh = k % S - pad
            row = tx[:, k, :]
            if sh < 0:
                row = jnp.concatenate(
                    [row[:, -sh:], jnp.zeros((N, -sh), row.dtype)], axis=1)
            elif sh > 0:
                row = jnp.concatenate(
                    [jnp.zeros((N, sh), row.dtype), row[:, :-sh]], axis=1)
            rows.append(row)
        shx = jnp.stack(rows, axis=1)            # (N, c2, L)
        zp = jnp.zeros((N, pad, L), x.dtype)
        xp = jnp.concatenate([zp, shx, zp], axis=1)   # odd shift_size padding
        conv = jnp.stack(
            [jnp.einsum("s,nsl->nl", w[j], xp[:, j:j + S, :], precision=hi)
             for j in range(c2)], axis=1)        # grouped 1x1 conv
        g, be, m, v = br["gamma"], br["beta"], br["mean"], br["var"]
        bn = ((conv - m[None, :, None]) / jnp.sqrt(v[None, :, None] + eps)
              * g[None, :, None] + be[None, :, None])
        outs.append(jax.nn.relu(bn))
    return jnp.concatenate(outs, axis=1)


# ----------------------------------------------------------------------------
# Demo / self-check
# ----------------------------------------------------------------------------
if __name__ == "__main__":
    # MTS_module(i_nc=4, o_nc=8, n_b=2); L=128 keeps the time axis lane-dense.
    N, C_IN, O_NC, N_B, L = 2, 4, 8, 2, 128
    o_ncs = _split_branch(O_NC, N_B + 1)          # [4, 2, 2]
    C1, c2 = o_ncs[0], o_ncs[1]

    key = jax.random.PRNGKey(0)
    k_x, k_l1, k_bn1, k_br = jax.random.split(key, 4)

    x = jax.random.normal(k_x, (N, C_IN, L), dtype=jnp.float32)

    def make_bn(k, c):
        kg, kb, km, kv = jax.random.split(k, 4)
        return dict(
            gamma=1.0 + 0.1 * jax.random.normal(kg, (c,), jnp.float32),
            beta=0.1 * jax.random.normal(kb, (c,), jnp.float32),
            mean=0.1 * jax.random.normal(km, (c,), jnp.float32),
            var=1.0 + 0.1 * jax.random.uniform(kv, (c,), jnp.float32),
        )

    bn1 = make_bn(k_bn1, C1)
    bound1 = 1.0 / (C_IN * 1) ** 0.5
    params = {
        "w1": jax.random.uniform(k_l1, (C1, C_IN, 1), jnp.float32, -bound1, bound1),
        "bn1_gamma": bn1["gamma"], "bn1_beta": bn1["beta"],
        "bn1_mean": bn1["mean"], "bn1_var": bn1["var"],
        "branches": [],
    }
    br_keys = jax.random.split(k_br, N_B)
    for b in range(N_B):
        S = 2 * b + 3
        kw, kbn = jax.random.split(br_keys[b], 2)
        bound = 1.0 / (S * 1) ** 0.5   # Conv1d(S*c2, c2, k=1, groups=c2): fan_in = S
        bn = make_bn(kbn, c2)
        params["branches"].append(dict(
            w=jax.random.uniform(kw, (c2, S, 1), jnp.float32, -bound, bound),
            gamma=bn["gamma"], beta=bn["beta"], mean=bn["mean"], var=bn["var"],
        ))

    fwd = jax.jit(functools.partial(mts_module_pallas, n_b=N_B))
    out = jax.block_until_ready(fwd(x, params))

    ref = _mts_reference(x, params, n_b=N_B)
    assert out.shape == (N, O_NC, L), out.shape
    max_err = float(jnp.max(jnp.abs(out - ref)))
    assert jnp.allclose(out, ref, atol=1e-3, rtol=1e-3), f"max |err| = {max_err}"

    print("KERNEL_OK")
</pallas_src>

<mosaic_0001>
module attributes {stable_mosaic.version = 11 : i64} {
  func.func @_mts_kernel(%arg0: memref<8x128xf32, #tpu.memory_space<vmem>>, %arg1: memref<8x8xf32, #tpu.memory_space<vmem>>, %arg2: memref<8x1xf32, #tpu.memory_space<vmem>>, %arg3: memref<3x8x8xf32, #tpu.memory_space<vmem>>, %arg4: memref<3x128x128xf32, #tpu.memory_space<vmem>>, %arg5: memref<8x1xf32, #tpu.memory_space<vmem>>, %arg6: memref<8x128xf32, #tpu.memory_space<vmem>>, %arg7: memref<8x128xf32, #tpu.memory_space<vmem>>) attributes {dimension_semantics = [], scalar_prefetch = 0 : i64, scratch_operands = 0 : i64, tpu.core_type = #tpu.core_type<tc>} {
    %c0 = arith.constant 0 : index
    %c0_0 = arith.constant 0 : index
    %0 = vector.load %arg1[%c0, %c0_0] : memref<8x8xf32, #tpu.memory_space<vmem>>, vector<8x8xf32>
    %c0_1 = arith.constant 0 : index
    %c0_2 = arith.constant 0 : index
    %1 = vector.load %arg0[%c0_1, %c0_2] : memref<8x128xf32, #tpu.memory_space<vmem>>, vector<8x128xf32>
    %cst = arith.constant dense<0.000000e+00> : vector<8x128xf32>
    %2 = tpu.matmul %0, %1, %cst {dimension_numbers = #tpu.dot_dimension_numbers<[1], [0], [0], [1], [0, 0, 1, 1], [], []>} : vector<8x8xf32>, vector<8x128xf32>, vector<8x128xf32> -> vector<8x128xf32>
    %c0_3 = arith.constant 0 : index
    %c0_4 = arith.constant 0 : index
    %3 = vector.load %arg2[%c0_3, %c0_4] : memref<8x1xf32, #tpu.memory_space<vmem>>, vector<8x1xf32>
    %4 = vector.broadcast %3 : vector<8x1xf32> to vector<8x128xf32>
    %5 = arith.addf %2, %4 : vector<8x128xf32>
    %cst_5 = arith.constant 0.000000e+00 : f32
    %6 = vector.broadcast %cst_5 : f32 to vector<8x128xf32>
    %7 = arith.maximumf %5, %6 : vector<8x128xf32>
    %c0_6 = arith.constant 0 : index
    %c0_7 = arith.constant 0 : index
    %8 = vector.load %arg6[%c0_6, %c0_7] : memref<8x128xf32, #tpu.memory_space<vmem>>, vector<8x128xf32>
    tpu.vector_store %arg6[%c0_6, %c0_7], %7 {strides = array<i32>} : memref<8x128xf32, #tpu.memory_space<vmem>>, vector<8x128xf32>,
    %cst_8 = arith.constant 0.000000e+00 : f32
    %9 = vector.broadcast %cst_8 : f32 to vector<8x128xf32>
    %c0_9 = arith.constant 0 : index
    %c0_10 = arith.constant 0 : index
    %c0_11 = arith.constant 0 : index
    %10 = vector.load %arg3[%c0_9, %c0_10, %c0_11] : memref<3x8x8xf32, #tpu.memory_space<vmem>>, vector<1x8x8xf32>
    %11 = vector.shape_cast %10 : vector<1x8x8xf32> to vector<8x8xf32>
    %cst_12 = arith.constant dense<0.000000e+00> : vector<8x128xf32>
    %12 = tpu.matmul %11, %7, %cst_12 {dimension_numbers = #tpu.dot_dimension_numbers<[1], [0], [0], [1], [0, 0, 1, 1], [], []>} : vector<8x8xf32>, vector<8x128xf32>, vector<8x128xf32> -> vector<8x128xf32>
    %c0_13 = arith.constant 0 : index
    %c0_14 = arith.constant 0 : index
    %c0_15 = arith.constant 0 : index
    %13 = vector.load %arg4[%c0_13, %c0_14, %c0_15] : memref<3x128x128xf32, #tpu.memory_space<vmem>>, vector<1x128x128xf32>
    %14 = vector.shape_cast %13 : vector<1x128x128xf32> to vector<128x128xf32>
    %cst_16 = arith.constant dense<0.000000e+00> : vector<8x128xf32>
    %15 = tpu.matmul %12, %14, %cst_16 {dimension_numbers = #tpu.dot_dimension_numbers<[1], [0], [0], [1], [0, 0, 1, 1], [], []>} : vector<8x128xf32>, vector<128x128xf32>, vector<8x128xf32> -> vector<8x128xf32>
    %16 = arith.addf %9, %15 : vector<8x128xf32>
    %c1 = arith.constant 1 : index
    %c0_17 = arith.constant 0 : index
    %c0_18 = arith.constant 0 : index
    %17 = vector.load %arg3[%c1, %c0_17, %c0_18] : memref<3x8x8xf32, #tpu.memory_space<vmem>>, vector<1x8x8xf32>
    %18 = vector.shape_cast %17 : vector<1x8x8xf32> to vector<8x8xf32>
    %cst_19 = arith.constant dense<0.000000e+00> : vector<8x128xf32>
    %19 = tpu.matmul %18, %7, %cst_19 {dimension_numbers = #tpu.dot_dimension_numbers<[1], [0], [0], [1], [0, 0, 1, 1], [], []>} : vector<8x8xf32>, vector<8x128xf32>, vector<8x128xf32> -> vector<8x128xf32>
    %c1_20 = arith.constant 1 : index
    %c0_21 = arith.constant 0 : index
    %c0_22 = arith.constant 0 : index
    %20 = vector.load %arg4[%c1_20, %c0_21, %c0_22] : memref<3x128x128xf32, #tpu.memory_space<vmem>>, vector<1x128x128xf32>
    %21 = vector.shape_cast %20 : vector<1x128x128xf32> to vector<128x128xf32>
    %cst_23 = arith.constant dense<0.000000e+00> : vector<8x128xf32>
    %22 = tpu.matmul %19, %21, %cst_23 {dimension_numbers = #tpu.dot_dimension_numbers<[1], [0], [0], [1], [0, 0, 1, 1], [], []>} : vector<8x128xf32>, vector<128x128xf32>, vector<8x128xf32> -> vector<8x128xf32>
    %23 = arith.addf %16, %22 : vector<8x128xf32>
    %c2 = arith.constant 2 : index
    %c0_24 = arith.constant 0 : index
    %c0_25 = arith.constant 0 : index
    %24 = vector.load %arg3[%c2, %c0_24, %c0_25] : memref<3x8x8xf32, #tpu.memory_space<vmem>>, vector<1x8x8xf32>
    %25 = vector.shape_cast %24 : vector<1x8x8xf32> to vector<8x8xf32>
    %cst_26 = arith.constant dense<0.000000e+00> : vector<8x128xf32>
    %26 = tpu.matmul %25, %7, %cst_26 {dimension_numbers = #tpu.dot_dimension_numbers<[1], [0], [0], [1], [0, 0, 1, 1], [], []>} : vector<8x8xf32>, vector<8x128xf32>, vector<8x128xf32> -> vector<8x128xf32>
    %c2_27 = arith.constant 2 : index
    %c0_28 = arith.constant 0 : index
    %c0_29 = arith.constant 0 : index
    %27 = vector.load %arg4[%c2_27, %c0_28, %c0_29] : memref<3x128x128xf32, #tpu.memory_space<vmem>>, vector<1x128x128xf32>
    %28 = vector.shape_cast %27 : vector<1x128x128xf32> to vector<128x128xf32>
    %cst_30 = arith.constant dense<0.000000e+00> : vector<8x128xf32>
    %29 = tpu.matmul %26, %28, %cst_30 {dimension_numbers = #tpu.dot_dimension_numbers<[1], [0], [0], [1], [0, 0, 1, 1], [], []>} : vector<8x128xf32>, vector<128x128xf32>, vector<8x128xf32> -> vector<8x128xf32>
    %30 = arith.addf %23, %29 : vector<8x128xf32>
    %c0_31 = arith.constant 0 : index
    %c0_32 = arith.constant 0 : index
    %31 = vector.load %arg5[%c0_31, %c0_32] : memref<8x1xf32, #tpu.memory_space<vmem>>, vector<8x1xf32>
    %32 = vector.broadcast %31 : vector<8x1xf32> to vector<8x128xf32>
    %33 = arith.addf %30, %32 : vector<8x128xf32>
    %cst_33 = arith.constant 0.000000e+00 : f32
    %34 = vector.broadcast %cst_33 : f32 to vector<8x128xf32>
    %35 = arith.maximumf %33, %34 : vector<8x128xf32>
    %c0_34 = arith.constant 0 : index
    %c0_35 = arith.constant 0 : index
    %36 = vector.load %arg7[%c0_34, %c0_35] : memref<8x128xf32, #tpu.memory_space<vmem>>, vector<8x128xf32>
    tpu.vector_store %arg7[%c0_34, %c0_35], %35 {strides = array<i32>} : memref<8x128xf32, #tpu.memory_space<vmem>>, vector<8x128xf32>,
    return
  }
}

</mosaic_0001>

<llo_original>
// kernel: tile.18
$region0: #{tile.18}
  #allocation0 [shape = 's32[1]{0}', space=sflag, size = 0x4, scoped, tag = 'scoped memory for tile.18']
  %s0 = inlined_call_operand.vmem [shape: f32[4], index: 0, kind: input, shape index: {}]
  %s1 = inlined_call_operand.vmem [shape: f32[2,4], index: 1, kind: output, shape index: {}]
  // Predicated region
  $region2: #{tile.18} parent=0 // pred_check
    _
  $region3: #{tile.18} parent=0 // pred_check_branch
    %3 = sbr.rel (0) target = $region5
  $region4: #{tile.18} parent=0 // pred_region
    _
  $region5: #{tile.18} parent=0 // pred_fallthru
    _
  %v4 = vld [vmem:[%s0] ss:$0 sm:$0xff]
  %5 = vst [vmem:[%s1] sm:$0x3] %v4

// kernel: tile.1
$region0: #{tile.1}
  %s0 = inlined_call_operand.vmem [shape: f32[2,4], index: 0, kind: input, shape index: {}]
  %s1 = inlined_call_operand.vmem [shape: f32[8,1], index: 1, kind: output, shape index: {}]
  $region1: #{tile.1} parent=0
    #allocation0 [shape = 'u8[4096]{0}', space=vmem, size = 0x1000, scoped, tag = 'scoped mem for input reshape']
    %s3 = sshllo.u32 0, 2
    %v4 = vld [vmem:[%s0] sm:%s3]
    %5 = vst [vmem:[#allocation0] sm:%s3] %v4
    %v6 = vld [vmem:[#allocation0] sm:$0x3]
    %vm7 = vcmask 7168
    %8 = vst.msk [vmem:[%s1] ss:$4 sm:$0x3] %vm7, %v6
    %v9 = vld [vmem:[#allocation0] sm:$0x3]
    %10 = vrot.lane.b32.xlu0 %v9, 127
    %v11 = vpop.permute.xlu0 %10
    %vm12 = vcmask 7168
    %s13 = scalar_lea.vmem %s1, 1
    %14 = vst.msk [vmem:[%s13] ss:$4 sm:$0x3] %vm12, %v11
    %v15 = vld [vmem:[#allocation0] sm:$0x3]
    %16 = vrot.lane.b32.xlu0 %v15, 126
    %v17 = vpop.permute.xlu0 %16
    %vm18 = vcmask 7168
    %s19 = scalar_lea.vmem %s1, 2
    %20 = vst.msk [vmem:[%s19] ss:$4 sm:$0x3] %vm18, %v17
    %v21 = vld [vmem:[#allocation0] sm:$0x3]
    %22 = vrot.lane.b32.xlu0 %v21, 125
    %v23 = vpop.permute.xlu0 %22
    %vm24 = vcmask 7168
    %s25 = scalar_lea.vmem %s1, 3
    %26 = vst.msk [vmem:[%s25] ss:$4 sm:$0x3] %vm24, %v23

// kernel: mts_module_pallas.1
$region0: #{mts_module_pallas.1}
  #allocation0 [shape = 'u32[]', space=smem, size = 0x4, offset = 0x4, fixed_abs, tag = 'smem constant byte address 0x4 - core index']
  #allocation1 [shape = 'u32[144,128]{1,0:T(1,128)}', space=vmem, size = 0x12000, scoped, tag = 'internal scratch']
  %s0 = inlined_call_operand.vmem [shape: f32[8,128], index: 0, kind: input, shape index: {}]
  %s1 = inlined_call_operand.vmem [shape: f32[8,8], index: 1, kind: input, shape index: {}]
  %s2 = inlined_call_operand.vmem [shape: f32[8,1], index: 2, kind: input, shape index: {}]
  %s3 = inlined_call_operand.vmem [shape: f32[3,8,8], index: 3, kind: input, shape index: {}]
  %s4 = inlined_call_operand.vmem [shape: f32[3,128,128], index: 4, kind: input, shape index: {}]
  %s5 = inlined_call_operand.vmem [shape: f32[8,1], index: 5, kind: input, shape index: {}]
  %s6 = inlined_call_operand.vmem [shape: f32[8,128], index: 6, kind: output, shape index: {0}]
  %s7 = inlined_call_operand.vmem [shape: f32[8,128], index: 7, kind: output, shape index: {1}]
  %8 = xla_tuple %s6, %s7
  %s9 = sld [smem:[#allocation0]]
  $region42: #{mts_module_pallas.1} parent=0
    _
  %s11 = ssub.s32 1, %s9
  %s12 = scalar_select 0, %s11, %s9
  // Predicated region
  $region2: #{mts_module_pallas.1} parent=0 // pred_check
    _
  $region3: #{mts_module_pallas.1} parent=0 // pred_check_branch
    %14 = sbr.rel (0) target = $region5
  $region4: #{mts_module_pallas.1} parent=0 // pred_region
    _
  $region5: #{mts_module_pallas.1} parent=0 // pred_fallthru
    _
  // Predicated region
  $region6: #{mts_module_pallas.1} parent=0 // pred_check
    _
  $region7: #{mts_module_pallas.1} parent=0 // pred_check_branch
    %16 = sbr.rel (0) target = $region9
  $region8: #{mts_module_pallas.1} parent=0 // pred_region
    _
  $region9: #{mts_module_pallas.1} parent=0 // pred_fallthru
    _
  // Predicated region
  $region10: #{mts_module_pallas.1} parent=0 // pred_check
    _
  $region11: #{mts_module_pallas.1} parent=0 // pred_check_branch
    %18 = sbr.rel (0) target = $region13
  $region12: #{mts_module_pallas.1} parent=0 // pred_region
    _
  $region13: #{mts_module_pallas.1} parent=0 // pred_fallthru
    _
  // Predicated region
  $region14: #{mts_module_pallas.1} parent=0 // pred_check
    _
  $region15: #{mts_module_pallas.1} parent=0 // pred_check_branch
    %20 = sbr.rel (0) target = $region17
  $region16: #{mts_module_pallas.1} parent=0 // pred_region
    _
  $region17: #{mts_module_pallas.1} parent=0 // pred_fallthru
    _
  // Predicated region
  $region18: #{mts_module_pallas.1} parent=0 // pred_check
    _
  $region19: #{mts_module_pallas.1} parent=0 // pred_check_branch
    %22 = sbr.rel (0) target = $region21
  $region20: #{mts_module_pallas.1} parent=0 // pred_region
    _
  $region21: #{mts_module_pallas.1} parent=0 // pred_fallthru
    _
  // Predicated region
  $region22: #{mts_module_pallas.1} parent=0 // pred_check
    _
  $region23: #{mts_module_pallas.1} parent=0 // pred_check_branch
    %24 = sbr.rel (0) target = $region25
  $region24: #{mts_module_pallas.1} parent=0 // pred_region
    _
  $region25: #{mts_module_pallas.1} parent=0 // pred_fallthru
    _
  %v25 = vld [vmem:[%s1] sm:$0xff]
  %v26 = vld [vmem:[%s0] sm:$0xff]
  %v27 = vld [vmem:[%s2] sm:$0xff]
  %29 = vset.pattern.permute.xlu0 0
  %30 = vperm.xlu0 %29, %v27
  %v31 = vpop.permute.xlu0 %30
  %vm33 = vcmask 64512
  %v35 = vsel %vm33, %v25, 0
  %37 = vmatprep.subr.mxu0 0.0
  %38 = vmatpush1.msra.mxu0 %v26
  %39 = vmatprep.subr.mxu0 0.0
  %40 = vmatpush1.msra.mxu0 0.0
  %41 = vmatprep.subr.mxu0 0.0
  %42 = vmatpush1.msra.mxu0 0.0
  %43 = vmatprep.subr.mxu0 0.0
  %44 = vmatpush1.msra.mxu0 0.0
  %45 = vmatprep.subr.mxu0 0.0
  %46 = vmatpush1.msra.mxu0 0.0
  %47 = vmatprep.subr.mxu0 0.0
  %48 = vmatpush1.msra.mxu0 0.0
  %49 = vmatprep.subr.mxu0 0.0
  %50 = vmatpush1.msra.mxu0 0.0
  %51 = vmatprep.subr.mxu0 0.0
  %52 = vmatpush1.msra.mxu0 0.0
  %53 = vmatprep.subr.mxu0 0.0
  %54 = vmatpush1.msra.mxu0 0.0
  %55 = vmatprep.subr.mxu0 0.0
  %56 = vmatpush1.msra.mxu0 0.0
  %57 = vmatprep.subr.mxu0 0.0
  %58 = vmatpush1.msra.mxu0 0.0
  %59 = vmatprep.subr.mxu0 0.0
  %60 = vmatpush1.msra.mxu0 0.0
  %61 = vmatprep.subr.mxu0 0.0
  %62 = vmatpush1.msra.mxu0 0.0
  %63 = vmatprep.subr.mxu0 0.0
  %64 = vmatpush1.msra.mxu0 0.0
  %65 = vmatprep.subr.mxu0 0.0
  %66 = vmatpush1.msra.mxu0 0.0
  %67 = vmatprep.subr.mxu0 0.0
  %68 = vmatpush1.msra.mxu0 0.0
  %69 = vmatprep.subr.mxu0 0.0
  %70 = vmatpush1.msra.mxu0 0.0
  %71 = vmatprep.subr.mxu0 0.0
  %72 = vmatpush1.msra.mxu0 0.0
  %73 = vmatprep.subr.mxu0 0.0
  %74 = vmatpush1.msra.mxu0 0.0
  %75 = vmatprep.subr.mxu0 0.0
  %76 = vmatpush1.msra.mxu0 0.0
  %77 = vmatprep.subr.mxu0 0.0
  %78 = vmatpush1.msra.mxu0 0.0
  %79 = vmatprep.subr.mxu0 0.0
  %80 = vmatpush1.msra.mxu0 0.0
  %81 = vmatprep.subr.mxu0 0.0
  %82 = vmatpush1.msra.mxu0 0.0
  %83 = vmatprep.subr.mxu0 0.0
  %84 = vmatpush1.msra.mxu0 0.0
  %85 = vmatprep.subr.mxu0 0.0
  %86 = vmatpush1.msra.mxu0 0.0
  %87 = vmatprep.subr.mxu0 0.0
  %88 = vmatpush1.msra.mxu0 0.0
  %89 = vmatprep.subr.mxu0 0.0
  %90 = vmatpush1.msra.mxu0 0.0
  %91 = vmatprep.subr.mxu0 0.0
  %92 = vmatpush1.msra.mxu0 0.0
  %93 = vmatprep.subr.mxu0 0.0
  %94 = vmatpush1.msra.mxu0 0.0
  %95 = vmatprep.subr.mxu0 0.0
  %96 = vmatpush1.msra.mxu0 0.0
  %97 = vmatprep.subr.mxu0 0.0
  %98 = vmatpush1.msra.mxu0 0.0
  %99 = vmatprep.subr.mxu0 0.0
  %100 = vmatpush1.msra.mxu0 0.0
  %101 = vmatprep.mubr.f32.mxu0 0.0
  %102 = vmatmul.mubr.f32.gmra.mrb[0].mxu0 %v35
  %v103 = vpop.f32.mrb[0].mxu0
  %v104 = vadd.f32 %v31, %v103
  %v105 = vpop.f32.mrb[0].mxu0
  %106 = vdwg.mxu0
  %v107 = vmax.f32 %v104, 0.0
  %108 = vst [vmem:[%s6] sm:$0xff] %v107
  %v109 = vld [vmem:[%s3] sm:$0xff]
  %v111 = vsel %vm33, %v109, 0
  %113 = vmatprep.subr.mxu0 0.0
  %114 = vmatpush1.msra.mxu0 %v107
  %115 = vmatprep.subr.mxu0 0.0
  %116 = vmatpush1.msra.mxu0 0.0
  %117 = vmatprep.subr.mxu0 0.0
  %118 = vmatpush1.msra.mxu0 0.0
  %119 = vmatprep.subr.mxu0 0.0
  %120 = vmatpush1.msra.mxu0 0.0
  %121 = vmatprep.subr.mxu0 0.0
  %122 = vmatpush1.msra.mxu0 0.0
  %123 = vmatprep.subr.mxu0 0.0
  %124 = vmatpush1.msra.mxu0 0.0
  %125 = vmatprep.subr.mxu0 0.0
  %126 = vmatpush1.msra.mxu0 0.0
  %127 = vmatprep.subr.mxu0 0.0
  %128 = vmatpush1.msra.mxu0 0.0
  %129 = vmatprep.subr.mxu0 0.0
  %130 = vmatpush1.msra.mxu0 0.0
  %131 = vmatprep.subr.mxu0 0.0
  %132 = vmatpush1.msra.mxu0 0.0
  %133 = vmatprep.subr.mxu0 0.0
  %134 = vmatpush1.msra.mxu0 0.0
  %135 = vmatprep.subr.mxu0 0.0
  %136 = vmatpush1.msra.mxu0 0.0
  %137 = vmatprep.subr.mxu0 0.0
  %138 = vmatpush1.msra.mxu0 0.0
  %139 = vmatprep.subr.mxu0 0.0
  %140 = vmatpush1.msra.mxu0 0.0
  %141 = vmatprep.subr.mxu0 0.0
  %142 = vmatpush1.msra.mxu0 0.0
  %143 = vmatprep.subr.mxu0 0.0
  %144 = vmatpush1.msra.mxu0 0.0
  %145 = vmatprep.subr.mxu0 0.0
  %146 = vmatpush1.msra.mxu0 0.0
  %147 = vmatprep.subr.mxu0 0.0
  %148 = vmatpush1.msra.mxu0 0.0
  %149 = vmatprep.subr.mxu0 0.0
  %150 = vmatpush1.msra.mxu0 0.0
  %151 = vmatprep.subr.mxu0 0.0
  %152 = vmatpush1.msra.mxu0 0.0
  %153 = vmatprep.subr.mxu0 0.0
  %154 = vmatpush1.msra.mxu0 0.0
  %155 = vmatprep.subr.mxu0 0.0
  %156 = vmatpush1.msra.mxu0 0.0
  %157 = vmatprep.subr.mxu0 0.0
  %158 = vmatpush1.msra.mxu0 0.0
  %159 = vmatprep.subr.mxu0 0.0
  %160 = vmatpush1.msra.mxu0 0.0
  %161 = vmatprep.subr.mxu0 0.0
  %162 = vmatpush1.msra.mxu0 0.0
  %163 = vmatprep.subr.mxu0 0.0
  %164 = vmatpush1.msra.mxu0 0.0
  %165 = vmatprep.subr.mxu0 0.0
  %166 = vmatpush1.msra.mxu0 0.0
  %167 = vmatprep.subr.mxu0 0.0
  %168 = vmatpush1.msra.mxu0 0.0
  %169 = vmatprep.subr.mxu0 0.0
  %170 = vmatpush1.msra.mxu0 0.0
  %171 = vmatprep.subr.mxu0 0.0
  %172 = vmatpush1.msra.mxu0 0.0
  %173 = vmatprep.subr.mxu0 0.0
  %174 = vmatpush1.msra.mxu0 0.0
  %175 = vmatprep.subr.mxu0 0.0
  %176 = vmatpush1.msra.mxu0 0.0
  %177 = vmatprep.mubr.f32.mxu0 0.0
  %178 = vmatmul.mubr.f32.gmra.mrb[0].mxu0 %v111
  %v179 = vpop.f32.mrb[0].mxu0
  %v180 = vadd.f32 0.0, %v179
  %v181 = vpop.f32.mrb[0].mxu0
  %182 = vdwg.mxu0
  %v183 = vld [vmem:[%s4] sm:$0xff]
  %v184 = vld [vmem:[%s4 + $0x8] sm:$0xff]
  %v185 = vld [vmem:[%s4 + $0x10] sm:$0xff]
  %v186 = vld [vmem:[%s4 + $0x18] sm:$0xff]
  %v187 = vld [vmem:[%s4 + $0x20] sm:$0xff]
  %v188 = vld [vmem:[%s4 + $0x28] sm:$0xff]
  %v189 = vld [vmem:[%s4 + $0x30] sm:$0xff]
  %v190 = vld [vmem:[%s4 + $0x38] sm:$0xff]
  %v191 = vld [vmem:[%s4 + $0x40] sm:$0xff]
  %v192 = vld [vmem:[%s4 + $0x48] sm:$0xff]
  %v193 = vld [vmem:[%s4 + $0x50] sm:$0xff]
  %v194 = vld [vmem:[%s4 + $0x58] sm:$0xff]
  %v195 = vld [vmem:[%s4 + $0x60] sm:$0xff]
  %v196 = vld [vmem:[%s4 + $0x68] sm:$0xff]
  %v197 = vld [vmem:[%s4 + $0x70] sm:$0xff]
  %v198 = vld [vmem:[%s4 + $0x78] sm:$0xff]
  %s199 = scalar_lea.vmem %s3, 8
  %v200 = vld [vmem:[%s199] sm:$0xff]
  %v202 = vsel %vm33, %v200, 0
  %204 = vmatprep.subr.mxu0 0.0
  %205 = vmatpush1.msra.mxu0 %v107
  %206 = vmatprep.subr.mxu0 0.0
  %207 = vmatpush1.msra.mxu0 0.0
  %208 = vmatprep.subr.mxu0 0.0
  %209 = vmatpush1.msra.mxu0 0.0
  %210 = vmatprep.subr.mxu0 0.0
  %211 = vmatpush1.msra.mxu0 0.0
  %212 = vmatprep.subr.mxu0 0.0
  %213 = vmatpush1.msra.mxu0 0.0
  %214 = vmatprep.subr.mxu0 0.0
  %215 = vmatpush1.msra.mxu0 0.0
  %216 = vmatprep.subr.mxu0 0.0
  %217 = vmatpush1.msra.mxu0 0.0
  %218 = vmatprep.subr.mxu0 0.0
  %219 = vmatpush1.msra.mxu0 0.0
  %220 = vmatprep.subr.mxu0 0.0
  %221 = vmatpush1.msra.mxu0 0.0
  %222 = vmatprep.subr.mxu0 0.0
  %223 = vmatpush1.msra.mxu0 0.0
  %224 = vmatprep.subr.mxu0 0.0
  %225 = vmatpush1.msra.mxu0 0.0
  %226 = vmatprep.subr.mxu0 0.0
  %227 = vmatpush1.msra.mxu0 0.0
  %228 = vmatprep.subr.mxu0 0.0
  %229 = vmatpush1.msra.mxu0 0.0
  %230 = vmatprep.subr.mxu0 0.0
  %231 = vmatpush1.msra.mxu0 0.0
  %232 = vmatprep.subr.mxu0 0.0
  %233 = vmatpush1.msra.mxu0 0.0
  %234 = vmatprep.subr.mxu0 0.0
  %235 = vmatpush1.msra.mxu0 0.0
  %236 = vmatprep.subr.mxu0 0.0
  %237 = vmatpush1.msra.mxu0 0.0
  %238 = vmatprep.subr.mxu0 0.0
  %239 = vmatpush1.msra.mxu0 0.0
  %240 = vmatprep.subr.mxu0 0.0
  %241 = vmatpush1.msra.mxu0 0.0
  %242 = vmatprep.subr.mxu0 0.0
  %243 = vmatpush1.msra.mxu0 0.0
  %244 = vmatprep.subr.mxu0 0.0
  %245 = vmatpush1.msra.mxu0 0.0
  %246 = vmatprep.subr.mxu0 0.0
  %247 = vmatpush1.msra.mxu0 0.0
  %248 = vmatprep.subr.mxu0 0.0
  %249 = vmatpush1.msra.mxu0 0.0
  %250 = vmatprep.subr.mxu0 0.0
  %251 = vmatpush1.msra.mxu0 0.0
  %252 = vmatprep.subr.mxu0 0.0
  %253 = vmatpush1.msra.mxu0 0.0
  %254 = vmatprep.subr.mxu0 0.0
  %255 = vmatpush1.msra.mxu0 0.0
  %256 = vmatprep.subr.mxu0 0.0
  %257 = vmatpush1.msra.mxu0 0.0
  %258 = vmatprep.subr.mxu0 0.0
  %259 = vmatpush1.msra.mxu0 0.0
  %260 = vmatprep.subr.mxu0 0.0
  %261 = vmatpush1.msra.mxu0 0.0
  %262 = vmatprep.subr.mxu0 0.0
  %263 = vmatpush1.msra.mxu0 0.0
  %264 = vmatprep.subr.mxu0 0.0
  %265 = vmatpush1.msra.mxu0 0.0
  %266 = vmatprep.subr.mxu0 0.0
  %267 = vmatpush1.msra.mxu0 0.0
  %268 = vmatprep.mubr.f32.mxu0 0.0
  %269 = vmatmul.mubr.f32.gmra.mrb[0].mxu0 %v202
  %v270 = vpop.f32.mrb[0].mxu0
  %v271 = vadd.f32 0.0, %v270
  %v272 = vpop.f32.mrb[0].mxu0
  %273 = vdwg.mxu0
  %s274 = scalar_lea.vmem %s4, 128
  %v275 = vld [vmem:[%s274] sm:$0xff]
  %v276 = vld [vmem:[%s274 + $0x8] sm:$0xff]
  %v277 = vld [vmem:[%s274 + $0x10] sm:$0xff]
  %v278 = vld [vmem:[%s274 + $0x18] sm:$0xff]
  %v279 = vld [vmem:[%s274 + $0x20] sm:$0xff]
  %v280 = vld [vmem:[%s274 + $0x28] sm:$0xff]
  %v281 = vld [vmem:[%s274 + $0x30] sm:$0xff]
  %v282 = vld [vmem:[%s274 + $0x38] sm:$0xff]
  %v283 = vld [vmem:[%s274 + $0x40] sm:$0xff]
  %v284 = vld [vmem:[%s274 + $0x48] sm:$0xff]
  %v285 = vld [vmem:[%s274 + $0x50] sm:$0xff]
  %v286 = vld [vmem:[%s274 + $0x58] sm:$0xff]
  %v287 = vld [vmem:[%s274 + $0x60] sm:$0xff]
  %v288 = vld [vmem:[%s274 + $0x68] sm:$0xff]
  %v289 = vld [vmem:[%s274 + $0x70] sm:$0xff]
  %v290 = vld [vmem:[%s274 + $0x78] sm:$0xff]
  %291 = vmatprep.subr.mxu0 0.0
  %292 = vmatpush1.msra.mxu0 %v275
  %293 = vmatprep.subr.mxu0 0.0
  %294 = vmatpush1.msra.mxu0 %v276
  %295 = vmatprep.subr.mxu0 0.0
  %296 = vmatpush1.msra.mxu0 %v277
  %297 = vmatprep.subr.mxu0 0.0
  %298 = vmatpush1.msra.mxu0 %v278
  %299 = vmatprep.subr.mxu0 0.0
  %300 = vmatpush1.msra.mxu0 %v279
  %301 = vmatprep.subr.mxu0 0.0
  %302 = vmatpush1.msra.mxu0 %v280
  %303 = vmatprep.subr.mxu0 0.0
  %304 = vmatpush1.msra.mxu0 %v281
  %305 = vmatprep.subr.mxu0 0.0
  %306 = vmatpush1.msra.mxu0 %v282
  %307 = vmatprep.subr.mxu0 0.0
  %308 = vmatpush1.msra.mxu0 %v283
  %309 = vmatprep.subr.mxu0 0.0
  %310 = vmatpush1.msra.mxu0 %v284
  %311 = vmatprep.subr.mxu0 0.0
  %312 = vmatpush1.msra.mxu0 %v285
  %313 = vmatprep.subr.mxu0 0.0
  %314 = vmatpush1.msra.mxu0 %v286
  %315 = vmatprep.subr.mxu0 0.0
  %316 = vmatpush1.msra.mxu0 %v287
  %317 = vmatprep.subr.mxu0 0.0
  %318 = vmatpush1.msra.mxu0 %v288
  %319 = vmatprep.subr.mxu0 0.0
  %320 = vmatpush1.msra.mxu0 %v289
  %321 = vmatprep.subr.mxu0 0.0
  %322 = vmatpush1.msra.mxu0 %v290
  %323 = vmatprep.subr.mxu0 0.0
  %324 = vmatpush1.msra.mxu0 0.0
  %325 = vmatprep.subr.mxu0 0.0
  %326 = vmatpush1.msra.mxu0 0.0
  %327 = vmatprep.subr.mxu0 0.0
  %328 = vmatpush1.msra.mxu0 0.0
  %329 = vmatprep.subr.mxu0 0.0
  %330 = vmatpush1.msra.mxu0 0.0
  %331 = vmatprep.subr.mxu0 0.0
  %332 = vmatpush1.msra.mxu0 0.0
  %333 = vmatprep.subr.mxu0 0.0
  %334 = vmatpush1.msra.mxu0 0.0
  %335 = vmatprep.subr.mxu0 0.0
  %336 = vmatpush1.msra.mxu0 0.0
  %337 = vmatprep.subr.mxu0 0.0
  %338 = vmatpush1.msra.mxu0 0.0
  %339 = vmatprep.subr.mxu0 0.0
  %340 = vmatpush1.msra.mxu0 0.0
  %341 = vmatprep.subr.mxu0 0.0
  %342 = vmatpush1.msra.mxu0 0.0
  %343 = vmatprep.subr.mxu0 0.0
  %344 = vmatpush1.msra.mxu0 0.0
  %345 = vmatprep.subr.mxu0 0.0
  %346 = vmatpush1.msra.mxu0 0.0
  %347 = vmatprep.subr.mxu0 0.0
  %348 = vmatpush1.msra.mxu0 0.0
  %349 = vmatprep.subr.mxu0 0.0
  %350 = vmatpush1.msra.mxu0 0.0
  %351 = vmatprep.subr.mxu0 0.0
  %352 = vmatpush1.msra.mxu0 0.0
  %353 = vmatprep.subr.mxu0 0.0
  %354 = vmatpush1.msra.mxu0 0.0
  %355 = vmatprep.mubr.f32.mxu0 0.0
  %356 = vmatmul.mubr.f32.gmra.mrb[0].mxu0 %v271
  %v357 = vpop.f32.mrb[0].mxu0
  %v358 = vadd.f32 0.0, %v357
  %v359 = vpop.f32.mrb[0].mxu0
  %360 = vdwg.mxu0
  %361 = vmatprep.subr.mxu0 0.0
  %362 = vmatpush1.msra.mxu0 %v183
  %363 = vmatprep.subr.mxu0 0.0
  %364 = vmatpush1.msra.mxu0 %v184
  %365 = vmatprep.subr.mxu0 0.0
  %366 = vmatpush1.msra.mxu0 %v185
  %367 = vmatprep.subr.mxu0 0.0
  %368 = vmatpush1.msra.mxu0 %v186
  %369 = vmatprep.subr.mxu0 0.0
  %370 = vmatpush1.msra.mxu0 %v187
  %371 = vmatprep.subr.mxu0 0.0
  %372 = vmatpush1.msra.mxu0 %v188
  %373 = vmatprep.subr.mxu0 0.0
  %374 = vmatpush1.msra.mxu0 %v189
  %375 = vmatprep.subr.mxu0 0.0
  %376 = vmatpush1.msra.mxu0 %v190
  %377 = vmatprep.subr.mxu0 0.0
  %378 = vmatpush1.msra.mxu0 %v191
  %379 = vmatprep.subr.mxu0 0.0
  %380 = vmatpush1.msra.mxu0 %v192
  %381 = vmatprep.subr.mxu0 0.0
  %382 = vmatpush1.msra.mxu0 %v193
  %383 = vmatprep.subr.mxu0 0.0
  %384 = vmatpush1.msra.mxu0 %v194
  %385 = vmatprep.subr.mxu0 0.0
  %386 = vmatpush1.msra.mxu0 %v195
  %387 = vmatprep.subr.mxu0 0.0
  %388 = vmatpush1.msra.mxu0 %v196
  %389 = vmatprep.subr.mxu0 0.0
  %390 = vmatpush1.msra.mxu0 %v197
  %391 = vmatprep.subr.mxu0 0.0
  %392 = vmatpush1.msra.mxu0 %v198
  %393 = vmatprep.subr.mxu0 0.0
  %394 = vmatpush1.msra.mxu0 0.0
  %395 = vmatprep.subr.mxu0 0.0
  %396 = vmatpush1.msra.mxu0 0.0
  %397 = vmatprep.subr.mxu0 0.0
  %398 = vmatpush1.msra.mxu0 0.0
  %399 = vmatprep.subr.mxu0 0.0
  %400 = vmatpush1.msra.mxu0 0.0
  %401 = vmatprep.subr.mxu0 0.0
  %402 = vmatpush1.msra.mxu0 0.0
  %403 = vmatprep.subr.mxu0 0.0
  %404 = vmatpush1.msra.mxu0 0.0
  %405 = vmatprep.subr.mxu0 0.0
  %406 = vmatpush1.msra.mxu0 0.0
  %407 = vmatprep.subr.mxu0 0.0
  %408 = vmatpush1.msra.mxu0 0.0
  %409 = vmatprep.subr.mxu0 0.0
  %410 = vmatpush1.msra.mxu0 0.0
  %411 = vmatprep.subr.mxu0 0.0
  %412 = vmatpush1.msra.mxu0 0.0
  %413 = vmatprep.subr.mxu0 0.0
  %414 = vmatpush1.msra.mxu0 0.0
  %415 = vmatprep.subr.mxu0 0.0
  %416 = vmatpush1.msra.mxu0 0.0
  %417 = vmatprep.subr.mxu0 0.0
  %418 = vmatpush1.msra.mxu0 0.0
  %419 = vmatprep.subr.mxu0 0.0
  %420 = vmatpush1.msra.mxu0 0.0
  %421 = vmatprep.subr.mxu0 0.0
  %422 = vmatpush1.msra.mxu0 0.0
  %423 = vmatprep.subr.mxu0 0.0
  %424 = vmatpush1.msra.mxu0 0.0
  %425 = vmatprep.mubr.f32.mxu0 0.0
  %426 = vmatmul.mubr.f32.gmra.mrb[0].mxu0 %v180
  %v427 = vpop.f32.mrb[0].mxu0
  %v428 = vadd.f32 %v358, %v427
  %v429 = vpop.f32.mrb[0].mxu0
  %430 = vdwg.mxu0
  %s431 = scalar_lea.vmem %s3, 16
  %v432 = vld [vmem:[%s431] sm:$0xff]
  %v434 = vsel %vm33, %v432, 0
  %436 = vmatprep.subr.mxu0 0.0
  %437 = vmatpush1.msra.mxu0 %v107
  %438 = vmatprep.subr.mxu0 0.0
  %439 = vmatpush1.msra.mxu0 0.0
  %440 = vmatprep.subr.mxu0 0.0
  %441 = vmatpush1.msra.mxu0 0.0
  %442 = vmatprep.subr.mxu0 0.0
  %443 = vmatpush1.msra.mxu0 0.0
  %444 = vmatprep.subr.mxu0 0.0
  %445 = vmatpush1.msra.mxu0 0.0
  %446 = vmatprep.subr.mxu0 0.0
  %447 = vmatpush1.msra.mxu0 0.0
  %448 = vmatprep.subr.mxu0 0.0
  %449 = vmatpush1.msra.mxu0 0.0
  %450 = vmatprep.subr.mxu0 0.0
  %451 = vmatpush1.msra.mxu0 0.0
  %452 = vmatprep.subr.mxu0 0.0
  %453 = vmatpush1.msra.mxu0 0.0
  %454 = vmatprep.subr.mxu0 0.0
  %455 = vmatpush1.msra.mxu0 0.0
  %456 = vmatprep.subr.mxu0 0.0
  %457 = vmatpush1.msra.mxu0 0.0
  %458 = vmatprep.subr.mxu0 0.0
  %459 = vmatpush1.msra.mxu0 0.0
  %460 = vmatprep.subr.mxu0 0.0
  %461 = vmatpush1.msra.mxu0 0.0
  %462 = vmatprep.subr.mxu0 0.0
  %463 = vmatpush1.msra.mxu0 0.0
  %464 = vmatprep.subr.mxu0 0.0
  %465 = vmatpush1.msra.mxu0 0.0
  %466 = vmatprep.subr.mxu0 0.0
  %467 = vmatpush1.msra.mxu0 0.0
  %468 = vmatprep.subr.mxu0 0.0
  %469 = vmatpush1.msra.mxu0 0.0
  %470 = vmatprep.subr.mxu0 0.0
  %471 = vmatpush1.msra.mxu0 0.0
  %472 = vmatprep.subr.mxu0 0.0
  %473 = vmatpush1.msra.mxu0 0.0
  %474 = vmatprep.subr.mxu0 0.0
  %475 = vmatpush1.msra.mxu0 0.0
  %476 = vmatprep.subr.mxu0 0.0
  %477 = vmatpush1.msra.mxu0 0.0
  %478 = vmatprep.subr.mxu0 0.0
  %479 = vmatpush1.msra.mxu0 0.0
  %480 = vmatprep.subr.mxu0 0.0
  %481 = vmatpush1.msra.mxu0 0.0
  %482 = vmatprep.subr.mxu0 0.0
  %483 = vmatpush1.msra.mxu0 0.0
  %484 = vmatprep.subr.mxu0 0.0
  %485 = vmatpush1.msra.mxu0 0.0
  %486 = vmatprep.subr.mxu0 0.0
  %487 = vmatpush1.msra.mxu0 0.0
  %488 = vmatprep.subr.mxu0 0.0
  %489 = vmatpush1.msra.mxu0 0.0
  %490 = vmatprep.subr.mxu0 0.0
  %491 = vmatpush1.msra.mxu0 0.0
  %492 = vmatprep.subr.mxu0 0.0
  %493 = vmatpush1.msra.mxu0 0.0
  %494 = vmatprep.subr.mxu0 0.0
  %495 = vmatpush1.msra.mxu0 0.0
  %496 = vmatprep.subr.mxu0 0.0
  %497 = vmatpush1.msra.mxu0 0.0
  %498 = vmatprep.subr.mxu0 0.0
  %499 = vmatpush1.msra.mxu0 0.0
  %500 = vmatprep.mubr.f32.mxu0 0.0
  %501 = vmatmul.mubr.f32.gmra.mrb[0].mxu0 %v434
  %v502 = vpop.f32.mrb[0].mxu0
  %v503 = vadd.f32 0.0, %v502
  %v504 = vpop.f32.mrb[0].mxu0
  %505 = vdwg.mxu0
  %s506 = scalar_lea.vmem %s4, 256
  %v507 = vld [vmem:[%s506] sm:$0xff]
  %v508 = vld [vmem:[%s506 + $0x8] sm:$0xff]
  %v509 = vld [vmem:[%s506 + $0x10] sm:$0xff]
  %v510 = vld [vmem:[%s506 + $0x18] sm:$0xff]
  %v511 = vld [vmem:[%s506 + $0x20] sm:$0xff]
  %v512 = vld [vmem:[%s506 + $0x28] sm:$0xff]
  %v513 = vld [vmem:[%s506 + $0x30] sm:$0xff]
  %v514 = vld [vmem:[%s506 + $0x38] sm:$0xff]
  %v515 = vld [vmem:[%s506 + $0x40] sm:$0xff]
  %v516 = vld [vmem:[%s506 + $0x48] sm:$0xff]
  %v517 = vld [vmem:[%s506 + $0x50] sm:$0xff]
  %v518 = vld [vmem:[%s506 + $0x58] sm:$0xff]
  %v519 = vld [vmem:[%s506 + $0x60] sm:$0xff]
  %v520 = vld [vmem:[%s506 + $0x68] sm:$0xff]
  %v521 = vld [vmem:[%s506 + $0x70] sm:$0xff]
  %v522 = vld [vmem:[%s506 + $0x78] sm:$0xff]
  %523 = vmatprep.subr.mxu0 0.0
  %524 = vmatpush1.msra.mxu0 %v507
  %525 = vmatprep.subr.mxu0 0.0
  %526 = vmatpush1.msra.mxu0 %v508
  %527 = vmatprep.subr.mxu0 0.0
  %528 = vmatpush1.msra.mxu0 %v509
  %529 = vmatprep.subr.mxu0 0.0
  %530 = vmatpush1.msra.mxu0 %v510
  %531 = vmatprep.subr.mxu0 0.0
  %532 = vmatpush1.msra.mxu0 %v511
  %533 = vmatprep.subr.mxu0 0.0
  %534 = vmatpush1.msra.mxu0 %v512
  %535 = vmatprep.subr.mxu0 0.0
  %536 = vmatpush1.msra.mxu0 %v513
  %537 = vmatprep.subr.mxu0 0.0
  %538 = vmatpush1.msra.mxu0 %v514
  %539 = vmatprep.subr.mxu0 0.0
  %540 = vmatpush1.msra.mxu0 %v515
  %541 = vmatprep.subr.mxu0 0.0
  %542 = vmatpush1.msra.mxu0 %v516
  %543 = vmatprep.subr.mxu0 0.0
  %544 = vmatpush1.msra.mxu0 %v517
  %545 = vmatprep.subr.mxu0 0.0
  %546 = vmatpush1.msra.mxu0 %v518
  %547 = vmatprep.subr.mxu0 0.0
  %548 = vmatpush1.msra.mxu0 %v519
  %549 = vmatprep.subr.mxu0 0.0
  %550 = vmatpush1.msra.mxu0 %v520
  %551 = vmatprep.subr.mxu0 0.0
  %552 = vmatpush1.msra.mxu0 %v521
  %553 = vmatprep.subr.mxu0 0.0
  %554 = vmatpush1.msra.mxu0 %v522
  %555 = vmatprep.subr.mxu0 0.0
  %556 = vmatpush1.msra.mxu0 0.0
  %557 = vmatprep.subr.mxu0 0.0
  %558 = vmatpush1.msra.mxu0 0.0
  %559 = vmatprep.subr.mxu0 0.0
  %560 = vmatpush1.msra.mxu0 0.0
  %561 = vmatprep.subr.mxu0 0.0
  %562 = vmatpush1.msra.mxu0 0.0
  %563 = vmatprep.subr.mxu0 0.0
  %564 = vmatpush1.msra.mxu0 0.0
  %565 = vmatprep.subr.mxu0 0.0
  %566 = vmatpush1.msra.mxu0 0.0
  %567 = vmatprep.subr.mxu0 0.0
  %568 = vmatpush1.msra.mxu0 0.0
  %569 = vmatprep.subr.mxu0 0.0
  %570 = vmatpush1.msra.mxu0 0.0
  %571 = vmatprep.subr.mxu0 0.0
  %572 = vmatpush1.msra.mxu0 0.0
  %573 = vmatprep.subr.mxu0 0.0
  %574 = vmatpush1.msra.mxu0 0.0
  %575 = vmatprep.subr.mxu0 0.0
  %576 = vmatpush1.msra.mxu0 0.0
  %577 = vmatprep.subr.mxu0 0.0
  %578 = vmatpush1.msra.mxu0 0.0
  %579 = vmatprep.subr.mxu0 0.0
  %580 = vmatpush1.msra.mxu0 0.0
  %581 = vmatprep.subr.mxu0 0.0
  %582 = vmatpush1.msra.mxu0 0.0
  %583 = vmatprep.subr.mxu0 0.0
  %584 = vmatpush1.msra.mxu0 0.0
  %585 = vmatprep.subr.mxu0 0.0
  %586 = vmatpush1.msra.mxu0 0.0
  %587 = vmatprep.mubr.f32.mxu0 0.0
  %588 = vmatmul.mubr.f32.gmra.mrb[0].mxu0 %v503
  %v589 = vpop.f32.mrb[0].mxu0
  %v590 = vadd.f32 0.0, %v589
  %v591 = vpop.f32.mrb[0].mxu0
  %592 = vdwg.mxu0
  %v593 = vadd.f32 %v428, %v590
  %v594 = vld [vmem:[%s5] sm:$0xff]
  %596 = vset.pattern.permute.xlu0 0
  %597 = vperm.xlu0 %596, %v594
  %v598 = vpop.permute.xlu0 %597
  %v600 = vadd.f32 %v593, %v598
  %v601 = vmax.f32 %v600, 0.0
  %602 = vst [vmem:[%s7] sm:$0xff] %v601
  // Predicated region
  $region26: #{mts_module_pallas.1} parent=0 // pred_check
    _
  $region27: #{mts_module_pallas.1} parent=0 // pred_check_branch
    %604 = sbr.rel (0) target = $region29
  $region28: #{mts_module_pallas.1} parent=0 // pred_region
    _
  $region29: #{mts_module_pallas.1} parent=0 // pred_fallthru
    _
  // Predicated region
  $region30: #{mts_module_pallas.1} parent=0 // pred_check
    _
  $region31: #{mts_module_pallas.1} parent=0 // pred_check_branch
    %606 = sbr.rel (0) target = $region33
  $region32: #{mts_module_pallas.1} parent=0 // pred_region
    _
  $region33: #{mts_module_pallas.1} parent=0 // pred_fallthru
    _
  // Predicated region
  $region34: #{mts_module_pallas.1} parent=0 // pred_check
    _
  $region35: #{mts_module_pallas.1} parent=0 // pred_check_branch
    %608 = sbr.rel (0) target = $region37
  $region36: #{mts_module_pallas.1} parent=0 // pred_region
    _
  $region37: #{mts_module_pallas.1} parent=0 // pred_fallthru
    _
  // Predicated region
  $region38: #{mts_module_pallas.1} parent=0 // pred_check
    _
  $region39: #{mts_module_pallas.1} parent=0 // pred_check_branch
    %610 = sbr.rel (0) target = $region41
  $region40: #{mts_module_pallas.1} parent=0 // pred_region
    _
  $region41: #{mts_module_pallas.1} parent=0 // pred_fallthru
    _

</llo_original>
